<compile_context>
chip_gen: v6e
topology: v6e:2x2x1
jax: 0.10.0
libtpu: 0.0.40
codegen_flags: <defaults>
</compile_context>

<pallas_src>
import math

import jax
import jax.numpy as jnp
from jax.experimental import pallas as pl
from jax.experimental.pallas import tpu as pltpu


def _ind_embedding_kernel(ind_ref, e_ref, tbl_ref, out_ref):
    # ind_ref: (tile_rows, G_pad) bf16 in {0, 1}   (index lookups, K-padded to >= 8)
    # e_ref:   (G_pad, G*D)       bf16 one-hot group-expansion matrix
    # tbl_ref: (2, G*D)           table dtype, table tiled G-fold along lanes
    # out_ref: (tile_rows, G*D)   gathered embeddings (lane-dense when G*D % 128 == 0)
    #
    # Index expansion on the MXU (vector-extended slot): sel[r, l] = ind[r, l // D],
    # exactly 0.0 or 1.0 because both operands are {0,1} and exactly one term of the
    # K-sum is nonzero per lane.
    sel = jnp.dot(ind_ref[...], e_ref[...], preferred_element_type=jnp.float32)
    # Pure 2-op VPU epilogue (compare + select); selects real table rows -> bit exact.
    t0 = tbl_ref[0:1, :]
    t1 = tbl_ref[1:2, :]
    out_ref[...] = jnp.where(sel != 0.0, t1, t0).astype(out_ref.dtype)


def _round_up(x, m):
    return ((x + m - 1) // m) * m


def ind_embedding(ind, table, *, target_tile_rows=2048,
                  min_pallas_bytes=256 * 1024, force_pallas=False):
    """ind: int array (any shape) with values in {0,1}; table: (2, D) -> ind.shape + (D,)."""
    D = table.shape[1]
    lead_shape = ind.shape
    N = math.prod(lead_shape) if lead_shape else 1
    out_dt = table.dtype
    itemsize = jnp.dtype(out_dt).itemsize

    # Fast path: for tiny outputs the fixed launch + grid-step overhead dominates any
    # kernel; a plain XLA select fuses into neighbours for free.
    if not force_pallas and N * D * itemsize < min_pallas_bytes:
        out = jnp.where(ind[..., None] != 0, table[1], table[0])
        return out.reshape(*lead_shape, D)

    # Lane-dense grouping: pack G consecutive lookups per output row so the output
    # block's last dim (G*D) is a multiple of 128 lanes -> unmasked stores.
    G = 128 // math.gcd(D, 128)
    if G > 16:
        # TODO(synk): D with a tiny power-of-2 factor (e.g. odd D) -> skip lane
        # grouping; stores fall back to masked partial vst but stay correct.
        G = 1
    GD = G * D
    G_pad = max(G, 8)          # keep the matmul K dim >= 8 (zero-padded columns/rows)

    n_rows = pl.cdiv(N, G)
    n_rows_arr = max(n_rows, 8)          # >= 8 sublanes even for tiny inputs
    pad_elems = n_rows_arr * G - N

    # --- tile sizing -----------------------------------------------------------
    ALIGN = 32   # sublane tile multiple that is safe for f32/bf16/int8 out + bf16 index

    # VMEM accounting per row of a tile, DOUBLE buffered, including the lane-padded
    # (-> 128 lanes) bf16 index block (this is what collided with v5e's 16 MiB default
    # scoped limit in v1).  Budget kept at 8 MiB -> headroom on v5e/v6e/v7x alike.
    per_row_bytes = GD * itemsize + 128 * 2
    budget_bytes = 8 * 1024 * 1024
    max_rows_by_vmem = max(ALIGN, (budget_bytes // (2 * per_row_bytes)) // ALIGN * ALIGN)

    tile_cap = min(target_tile_rows, max_rows_by_vmem)
    tile_cap = max(ALIGN, (tile_cap // ALIGN) * ALIGN)

    if n_rows_arr <= tile_cap:
        tile_rows = n_rows_arr           # single full-extent block (any size allowed)
        grid = 1
        if n_rows_arr >= 512:
            # enough work: give both v7x TensorCores a block
            tile_rows = _round_up(pl.cdiv(n_rows_arr, 2), ALIGN)
            grid = pl.cdiv(n_rows_arr, tile_rows)
    else:
        tile_rows = tile_cap
        grid = pl.cdiv(n_rows_arr, tile_rows)
        if grid < 8 and grid % 2 == 1:
            # avoid a small odd grid: one v7x TensorCore would idle for a whole step
            tile_rows = min(tile_cap, _round_up(pl.cdiv(n_rows_arr, grid + 1), ALIGN))
            grid = pl.cdiv(n_rows_arr, tile_rows)

    # --- operand prep (all tiny / O(N) XLA ops, fused by the compiler) ----------
    ind_flat = ind.reshape(N)
    if pad_elems:
        ind_flat = jnp.pad(ind_flat, (0, pad_elems))
    # bf16 {0,1} index: exact, halves the lane-padded VMEM/HBM cost vs int32/f32,
    # and feeds the MXU directly.
    ind01 = (ind_flat != 0).astype(jnp.bfloat16).reshape(n_rows_arr, G)
    if G_pad > G:
        ind01 = jnp.pad(ind01, ((0, 0), (0, G_pad - G)))

    # One-hot group-expansion matrix E[g, l] = (l // D == g), K-padded with zero rows.
    lane_group = jnp.arange(GD) // D
    e_mat = (lane_group[None, :] == jnp.arange(G_pad)[:, None]).astype(jnp.bfloat16)

    tbl_tiled = jnp.tile(table, (1, G))      # (2, G*D), ~1 KiB

    out = pl.pallas_call(
        _ind_embedding_kernel,
        out_shape=jax.ShapeDtypeStruct((n_rows_arr, GD), out_dt),
        grid=(grid,),
        in_specs=[
            pl.BlockSpec((tile_rows, G_pad), lambda i: (i, 0)),   # index tile
            pl.BlockSpec((G_pad, GD), lambda i: (0, 0)),          # expansion matrix
            pl.BlockSpec((2, GD), lambda i: (0, 0)),              # full (tiny) table
        ],
        out_specs=pl.BlockSpec((tile_rows, GD), lambda i: (i, 0)),
        compiler_params=pltpu.CompilerParams(
            dimension_semantics=("parallel",),
            vmem_limit_bytes=32 * 1024 * 1024,
        ),
    )(ind01, e_mat, tbl_tiled)

    out = out.reshape(n_rows_arr * G, D)
    if pad_elems:
        out = out[:N]
    return out.reshape(*lead_shape, D)


if __name__ == "__main__":
    key = jax.random.PRNGKey(0)
    k_tbl, k1, k2, k3, k_tbl8, k4 = jax.random.split(key, 6)

    # emb_conf.ind_emb = 32 (embedding dim); deterministic nn.Embedding(2, D) init.
    D = 32
    w = jax.random.normal(k_tbl, (2, D), dtype=jnp.float32)

    # 1) tiny shape (B=2, S=8): wrapper fast-path (plain XLA select).
    x1 = jax.random.bernoulli(k1, 0.5, (2, 8)).astype(jnp.int32)
    o1 = jax.block_until_ready(ind_embedding(x1, w))
    assert o1.shape == (2, 8, D), o1.shape
    assert o1.dtype == jnp.float32, o1.dtype
    assert jnp.array_equal(o1, w[x1])

    # 2) same tiny shape forced through the Pallas kernel (grid=1, padded rows).
    o1p = jax.block_until_ready(ind_embedding(x1, w, force_pallas=True))
    assert jnp.array_equal(o1p, w[x1])

    # 3) mid-size: 2-step even grid with a ragged last block.
    x2 = jax.random.bernoulli(k2, 0.5, (4, 1000)).astype(jnp.int32)
    o2 = jax.block_until_ready(ind_embedding(x2, w))
    assert o2.shape == (4, 1000, D), o2.shape
    assert jnp.array_equal(o2, w[x2])

    # 4) larger: multi-step even grid exercising the VMEM-capped 2048-row tiles.
    x3 = jax.random.bernoulli(k3, 0.5, (8, 4096)).astype(jnp.int32)
    o3 = jax.block_until_ready(ind_embedding(x3, w))
    assert o3.shape == (8, 4096, D), o3.shape
    assert jnp.array_equal(o3, w[x3])

    # 5) small embedding dim (D=8 -> G=16 lane packing), forced through Pallas.
    D8 = 8
    w8 = jax.random.normal(k_tbl8, (2, D8), dtype=jnp.float32)
    x4 = jax.random.bernoulli(k4, 0.5, (2, 256)).astype(jnp.int32)
    o4 = jax.block_until_ready(ind_embedding(x4, w8, force_pallas=True))
    assert o4.shape == (2, 256, D8), o4.shape
    assert jnp.array_equal(o4, w8[x4])

    print("KERNEL_OK")
</pallas_src>

<mosaic_0001>
module attributes {stable_mosaic.version = 11 : i64} {
  func.func @_ind_embedding_kernel(%arg0: i32, %arg1: memref<8x8xbf16, #tpu.memory_space<vmem>>, %arg2: memref<8x128xbf16, #tpu.memory_space<vmem>>, %arg3: memref<2x128xf32, #tpu.memory_space<vmem>>, %arg4: memref<8x128xf32, #tpu.memory_space<vmem>>) attributes {dimension_semantics = [#tpu.dimension_semantics<parallel>], iteration_bounds = array<i64: 1>, scalar_prefetch = 0 : i64, scratch_operands = 0 : i64, tpu.core_type = #tpu.core_type<tc>, window_params = [{transform_indices = @transform_0, window_bounds = array<i64: 8, 8>}, {pipeline_mode = #tpu.pipeline_mode<synchronous>, transform_indices = @transform_1, window_bounds = array<i64: 8, 128>}, {pipeline_mode = #tpu.pipeline_mode<synchronous>, transform_indices = @transform_2, window_bounds = array<i64: 2, 128>}, {transform_indices = @transform_3, window_bounds = array<i64: 8, 128>}]} {
    %c0 = arith.constant 0 : index
    %c0_0 = arith.constant 0 : index
    %0 = vector.load %arg1[%c0, %c0_0] : memref<8x8xbf16, #tpu.memory_space<vmem>>, vector<8x8xbf16>
    %c0_1 = arith.constant 0 : index
    %c0_2 = arith.constant 0 : index
    %1 = vector.load %arg2[%c0_1, %c0_2] : memref<8x128xbf16, #tpu.memory_space<vmem>>, vector<8x128xbf16>
    %cst = arith.constant dense<0.000000e+00> : vector<8x128xf32>
    %2 = tpu.matmul %0, %1, %cst {dimension_numbers = #tpu.dot_dimension_numbers<[1], [0], [0], [1], [0, 0, 1, 1], [], []>} : vector<8x8xbf16>, vector<8x128xbf16>, vector<8x128xf32> -> vector<8x128xf32>
    %c0_3 = arith.constant 0 : index
    %c0_4 = arith.constant 0 : index
    %3 = vector.load %arg3[%c0_3, %c0_4] : memref<2x128xf32, #tpu.memory_space<vmem>>, vector<1x128xf32>
    %c1 = arith.constant 1 : index
    %c0_5 = arith.constant 0 : index
    %4 = vector.load %arg3[%c1, %c0_5] : memref<2x128xf32, #tpu.memory_space<vmem>>, vector<1x128xf32>
    %cst_6 = arith.constant 0.000000e+00 : f32
    %5 = vector.broadcast %cst_6 : f32 to vector<8x128xf32>
    %6 = arith.cmpf one, %2, %5 : vector<8x128xf32>
    %7 = vector.shape_cast %4 : vector<1x128xf32> to vector<1x128xf32>
    %8 = vector.broadcast %7 : vector<1x128xf32> to vector<8x128xf32>
    %9 = vector.shape_cast %3 : vector<1x128xf32> to vector<1x128xf32>
    %10 = vector.broadcast %9 : vector<1x128xf32> to vector<8x128xf32>
    %11 = arith.select %6, %8, %10 : vector<8x128xi1>, vector<8x128xf32>
    %c0_7 = arith.constant 0 : index
    %c0_8 = arith.constant 0 : index
    %12 = vector.load %arg4[%c0_7, %c0_8] : memref<8x128xf32, #tpu.memory_space<vmem>>, vector<8x128xf32>
    tpu.vector_store %arg4[%c0_7, %c0_8], %11 {strides = array<i32>} : memref<8x128xf32, #tpu.memory_space<vmem>>, vector<8x128xf32>,
    return
  }
  func.func @transform_0(%arg0: i32) -> (i32, i32) {
    %c0_i32 = arith.constant 0 : i32
    %c0_i32_0 = arith.constant 0 : i32
    return %arg0, %c0_i32 : i32, i32
  }
  func.func @transform_1(%arg0: i32) -> (i32, i32) {
    %c0_i32 = arith.constant 0 : i32
    %c0_i32_0 = arith.constant 0 : i32
    %c0_i32_1 = arith.constant 0 : i32
    return %c0_i32, %c0_i32_0 : i32, i32
  }
  func.func @transform_2(%arg0: i32) -> (i32, i32) {
    %c0_i32 = arith.constant 0 : i32
    %c0_i32_0 = arith.constant 0 : i32
    %c0_i32_1 = arith.constant 0 : i32
    return %c0_i32, %c0_i32_0 : i32, i32
  }
  func.func @transform_3(%arg0: i32) -> (i32, i32) {
    %c0_i32 = arith.constant 0 : i32
    %c0_i32_0 = arith.constant 0 : i32
    return %arg0, %c0_i32 : i32, i32
  }
}

</mosaic_0001>

<llo_original>
// kernel: tpu_custom_call.1
$region0: #{tpu_custom_call.1}
  #allocation0 [shape = 'u32[]', space=smem, size = 0x4, offset = 0x4, fixed_abs, tag = 'smem constant byte address 0x4 - core index']
  #allocation1 [shape = 'u32[144,128]{1,0:T(1,128)}', space=vmem, size = 0x12000, scoped, tag = 'internal scratch']
  %s0 = inlined_call_operand.hbm [shape: bf16[8,8], index: 0, kind: input, shape index: {}]
  %s1 = inlined_call_operand.hbm [shape: bf16[8,128], index: 1, kind: input, shape index: {}]
  %s2 = inlined_call_operand.vmem [shape: f32[2,128], index: 2, kind: input, shape index: {}]
  %s3 = inlined_call_operand.hbm [shape: f32[8,128], index: 3, kind: output, shape index: {}]
  %s4 = sld [smem:[#allocation0]]
  $region30: #{tpu_custom_call.1} parent=0
    _
  %s6 = ssub.s32 1, %s4
  %s7 = scalar_select 0, %s6, %s4
  $region1: #{tpu_custom_call.1} parent=0
    #allocation2 [shape = 'u8[2048]{0}', space=vmem, size = 0x800, scoped, tag = 'input window, operand 0, single buffered']
    #allocation3 [shape = 's32[1]{0}', space=sflag, size = 0x4, scoped, tag = 'scoped memory for tpu_custom_call.1']
    #allocation4 [shape = 's32[1]{0}', space=sflag, size = 0x4, scoped, tag = 'scoped memory for tpu_custom_call.1']
    #allocation5 [shape = 'u8[2048]{0}', space=vmem, size = 0x800, scoped, tag = 'input window, operand 1, single buffered']
    #allocation6 [shape = 's32[1]{0}', space=sflag, size = 0x4, scoped, tag = 'scoped memory for tpu_custom_call.1']
    #allocation7 [shape = 'u8[4096]{0}', space=vmem, size = 0x1000, scoped, tag = 'output window, operand 0, single buffered']
    %8 = vsyncpa [#allocation3], 0
    %9 = vsyncpa [#allocation6], 0
    %10 = vsyncpa [#allocation4], 0
    // Predicated region
    $region2: #{tpu_custom_call.1} parent=1 // pred_check
      _
    $region3: #{tpu_custom_call.1} parent=1 // pred_check_branch
      %12 = sbr.rel (0) target = $region5
    $region4: #{tpu_custom_call.1} parent=1 // pred_region
      %s14 = ssub.s32 64, 64
      %15 = vsyncadd [#allocation3], %s14
      %s17 = sshll.u32 [#allocation2], 4
      %s18 = int_to_ptr.vmem [resolvable:$true] %s17
      %20 = dma.hbm_to_vmem [thread:$0]  %s0, 64, %s18, [#allocation3]
    $region5: #{tpu_custom_call.1} parent=1 // pred_fallthru
      _
    // Predicated region
    $region6: #{tpu_custom_call.1} parent=1 // pred_check
      _
    $region7: #{tpu_custom_call.1} parent=1 // pred_check_branch
      %22 = sbr.rel (0) target = $region9
    $region8: #{tpu_custom_call.1} parent=1 // pred_region
      %s24 = ssub.s32 64, 64
      %25 = vsyncadd [#allocation6], %s24
      %s27 = sshll.u32 [#allocation5], 4
      %s28 = int_to_ptr.vmem [resolvable:$true] %s27
      %30 = dma.hbm_to_vmem [thread:$0]  %s1, 64, %s28, [#allocation6]
    $region9: #{tpu_custom_call.1} parent=1 // pred_fallthru
      _
    // Predicated region
    $region10: #{tpu_custom_call.1} parent=1 // pred_check
      _
    $region11: #{tpu_custom_call.1} parent=1 // pred_check_branch
      %32 = sbr.rel (0) target = $region13
    $region12: #{tpu_custom_call.1} parent=1 // pred_region
      _
    $region13: #{tpu_custom_call.1} parent=1 // pred_fallthru
      _
    // Predicated region
    $region14: #{tpu_custom_call.1} parent=1 // pred_check
      _
    $region15: #{tpu_custom_call.1} parent=1 // pred_check_branch
      %34 = sbr.rel (0) target = $region17
    $region16: #{tpu_custom_call.1} parent=1 // pred_region
      %35 = dma.done [#allocation3], 64
    $region17: #{tpu_custom_call.1} parent=1 // pred_fallthru
      _
    // Predicated region
    $region18: #{tpu_custom_call.1} parent=1 // pred_check
      _
    $region19: #{tpu_custom_call.1} parent=1 // pred_check_branch
      %37 = sbr.rel (0) target = $region21
    $region20: #{tpu_custom_call.1} parent=1 // pred_region
      %38 = dma.done [#allocation6], 64
    $region21: #{tpu_custom_call.1} parent=1 // pred_fallthru
      _
    %v40 = vld [vmem:[#allocation2] sm:$0xf]
    %v41 = vld [vmem:[#allocation5] sm:$0xf]
    %vm42 = vcmask 64512
    %v44 = vsel %vm42, %v40, 0
    %vm46 = vcmask 1043456
    %v48 = vsel %vm46, %v41, 0
    %50 = vmatprep.subr.bf16.mxu0 0
    %51 = vmatpush1.bf16.msra.mxu0 0
    %52 = vmatprep.subr.bf16.mxu0 0
    %53 = vmatpush1.bf16.msra.mxu0 0
    %54 = vmatprep.subr.bf16.mxu0 0
    %55 = vmatpush1.bf16.msra.mxu0 0
    %56 = vmatprep.subr.bf16.mxu0 0
    %57 = vmatpush1.bf16.msra.mxu0 0
    %58 = vmatprep.subr.bf16.mxu0 0
    %59 = vmatpush1.bf16.msra.mxu0 0
    %60 = vmatprep.subr.bf16.mxu0 0
    %61 = vmatpush1.bf16.msra.mxu0 0
    %62 = vmatprep.subr.bf16.mxu0 0
    %63 = vmatpush1.bf16.msra.mxu0 0
    %64 = vmatprep.subr.bf16.mxu0 0
    %65 = vmatpush1.bf16.msra.mxu0 %v48
    %66 = vmatprep.subr.bf16.mxu0 0
    %67 = vmatpush2.bf16.msra.mxu0 0
    %68 = vmatprep.subr.bf16.mxu0 0
    %69 = vmatpush2.bf16.msra.mxu0 0
    %70 = vmatprep.subr.bf16.mxu0 0
    %71 = vmatpush2.bf16.msra.mxu0 0
    %72 = vmatprep.subr.bf16.mxu0 0
    %73 = vmatpush2.bf16.msra.mxu0 0
    %74 = vmatprep.subr.bf16.mxu0 0
    %75 = vmatpush2.bf16.msra.mxu0 0
    %76 = vmatprep.subr.bf16.mxu0 0
    %77 = vmatpush2.bf16.msra.mxu0 0
    %78 = vmatprep.subr.bf16.mxu0 0
    %79 = vmatpush2.bf16.msra.mxu0 0
    %80 = vmatprep.subr.bf16.mxu0 0
    %81 = vmatpush2.bf16.msra.mxu0 0
    %82 = vmatprep.mubr.bf16.mxu0 0
    %83 = vmatmul.mubr.bf16.gmra.mxu0 %v44
    %v84 = vpop.f32.mrf.mxu0
    %v85 = vadd.f32 0.0, %v84
    %v86 = vpop.f32.mrf.mxu0
    %v87 = vpop.f32.mrf.mxu0
    %v88 = vpop.f32.mrf.mxu0
    %89 = vdwg.mxu0
    %v90 = vld [vmem:[%s2] sm:$0x1]
    %v91 = vld [vmem:[%s2 + $0x1] sm:$0x1]
    %vm92 = vcmp.ne.f32.partialorder %v85, 0.0
    %v93 = vlaneseq
    %v94 = vshrl.u32 %v93, 7
    %v95 = vsub.s32 0, %v94
    %v96 = vrot.slane %v91, %v95
    %v97 = vlaneseq
    %v98 = vshrl.u32 %v97, 7
    %v99 = vsub.s32 0, %v98
    %v100 = vrot.slane %v90, %v99
    %v101 = vsel %vm92, %v96, %v100
    %102 = vst [vmem:[#allocation7] sm:$0xff] %v101
    // Predicated region
    $region22: #{tpu_custom_call.1} parent=1 // pred_check
      _
    $region23: #{tpu_custom_call.1} parent=1 // pred_check_branch
      %104 = sbr.rel (0) target = $region25
    $region24: #{tpu_custom_call.1} parent=1 // pred_region
      %s106 = ssub.s32 128, 128
      %107 = vsyncadd [#allocation4], %s106
      %s109 = sshll.u32 [#allocation7], 4
      %s110 = int_to_ptr.vmem [resolvable:$true] %s109
      %112 = dma.vmem_to_hbm [thread:$0]  %s110, 128, %s3, [#allocation4]
    $region25: #{tpu_custom_call.1} parent=1 // pred_fallthru
      _
    // Predicated region
    $region26: #{tpu_custom_call.1} parent=1 // pred_check
      _
    $region27: #{tpu_custom_call.1} parent=1 // pred_check_branch
      %114 = sbr.rel (0) target = $region29
    $region28: #{tpu_custom_call.1} parent=1 // pred_region
      %115 = dma.done [#allocation4], 128
    $region29: #{tpu_custom_call.1} parent=1 // pred_fallthru
      _
    %116 = vsyncpa [#allocation3], 1
    %117 = vsyncpa [#allocation6], 1
    %118 = vsyncpa [#allocation4], 1

</llo_original>
